<compile_context>
chip_gen: v6e
topology: v6e:2x2x1
jax: 0.10.0
libtpu: 0.0.40
codegen_flags: <defaults>
</compile_context>

<pallas_src>
import functools

import jax
import jax.numpy as jnp
from jax import lax
from jax.experimental import pallas as pl
from jax.experimental.pallas import tpu as pltpu

_MIN = 1e-05
_MAX = 1e06
_LANE_CHOICES = (2048, 1024, 512, 256, 128)


def _mean_act_kernel(x_ref, o_ref, *, compute_dtype):
    x = x_ref[...].astype(compute_dtype)
    y = jnp.clip(jnp.exp(x), _MIN, _MAX)      # EUP exp + VPU clip; HBM-bound anyway
    o_ref[...] = y.astype(o_ref.dtype)


def _mean_act_jnp(x):
    # Plain-JAX fallback for the tiny ragged tail / empty arrays.
    return jnp.clip(jnp.exp(x.astype(jnp.float32)), _MIN, _MAX).astype(x.dtype)


@functools.lru_cache(maxsize=None)
def _chip_generation():
    """Coarse TPU generation detection (robust string match on device_kind)."""
    try:
        kind = jax.devices()[0].device_kind.lower()
    except Exception:  # pragma: no cover - no devices / non-TPU backend
        return None
    if "v7" in kind:
        return "v7x"
    if "v6" in kind:
        return "v6e"
    if "v5" in kind and ("lite" in kind or "5e" in kind):
        return "v5e"
    return None


def _chip_block_config(dtype):
    """Return (target_block_bytes, vmem_limit_bytes_or_None, compute_dtype)."""
    gen = _chip_generation()
    if gen == "v7x":
        target, vmem_limit = 8 << 20, 48 << 20     # 3.2 TB/s HBM, 64 MiB VMEM
    elif gen == "v6e":
        target, vmem_limit = 6 << 20, None         # 24 MiB resident < 32 MiB default
    elif gen == "v5e":
        target, vmem_limit = 3 << 20, None         # 12 MiB resident < 16 MiB default
    else:
        target, vmem_limit = 4 << 20, 32 << 20     # conservative unknown-chip default

    dt = jnp.dtype(dtype)
    if dt == jnp.dtype(jnp.bfloat16) and gen in ("v6e", "v7x"):
        compute_dtype = jnp.bfloat16               # bf16 VPU/EUP: skip f32 round-trip
    else:
        compute_dtype = jnp.float32
    # f32 intermediates roughly double live bytes for sub-32-bit inputs.
    if dt.itemsize < 4 and compute_dtype == jnp.float32:
        target //= 2
    return target, vmem_limit, compute_dtype


def _mean_act_flat(x_flat: jax.Array, donate: bool = False) -> jax.Array:
    """Kernel over a flat array whose length is a multiple of 128."""
    n = x_flat.size
    dtype = x_flat.dtype
    itemsize = jnp.dtype(dtype).itemsize
    target_bytes, vmem_limit, compute_dtype = _chip_block_config(dtype)

    # Sublane packing of the I/O dtype: 8 (f32), 16 (bf16/f16), 32 (1-byte).
    sub = max(8, (4 // itemsize) * 8)

    # Widest lane-dense column count that divides n (unmasked full-width
    # lane-axis stores).
    lanes = next(c for c in _LANE_CHOICES if n % c == 0)
    rows = n // lanes
    x2d = x_flat.reshape(rows, lanes)

    # Row tile: multiple of the sublane packing, sized to ~target_bytes, never
    # larger than the rounded-up row count. On v7x keep >=2 blocks so both
    # TensorCores stream (dimension_semantics=("parallel",)).
    tr = max(sub, (target_bytes // (lanes * itemsize)) // sub * sub)
    rows_r = pl.cdiv(rows, sub) * sub
    tr = min(tr, rows_r)
    if _chip_generation() == "v7x" and rows_r >= 2 * sub:
        tr = min(tr, pl.cdiv(rows_r, 2 * sub) * sub)
    grid = (pl.cdiv(rows, tr),)

    cp_kwargs = dict(dimension_semantics=("parallel",))
    if vmem_limit is not None:
        cp_kwargs["vmem_limit_bytes"] = vmem_limit

    kernel = functools.partial(_mean_act_kernel, compute_dtype=compute_dtype)
    out2d = pl.pallas_call(
        kernel,
        out_shape=jax.ShapeDtypeStruct((rows, lanes), dtype),
        grid_spec=pltpu.PrefetchScalarGridSpec(
            num_scalar_prefetch=0,
            grid=grid,
            in_specs=[pl.BlockSpec((tr, lanes), lambda i: (i, 0))],
            out_specs=pl.BlockSpec((tr, lanes), lambda i: (i, 0)),
        ),
        compiler_params=pltpu.CompilerParams(**cp_kwargs),
        cost_estimate=pl.CostEstimate(
            flops=2 * n,
            transcendentals=n,
            bytes_accessed=2 * n * itemsize,
        ),
        input_output_aliases=({0: 0} if donate else {}),
    )(x2d)
    return out2d.reshape(-1)


def mean_act(x: jax.Array, *, donate: bool = False) -> jax.Array:
    """clamp(exp(x), 1e-5, 1e6) — elementwise, any shape, floating dtypes.

    Set donate=True only if the caller donates x (e.g. jit donate_argnums);
    otherwise the requested aliasing forces a defensive copy.
    """
    if not jnp.issubdtype(x.dtype, jnp.floating):
        raise TypeError(f"MeanAct expects a floating dtype, got {x.dtype}")
    orig_shape = x.shape
    n = x.size
    if n == 0:
        return x
    x_flat = x.reshape(-1)

    if n % 128 == 0:
        # Common case: reshape is free, no padding/assembly passes at all.
        return _mean_act_flat(x_flat, donate=donate).reshape(orig_shape)

    # Ragged case: aligned prefix through the kernel, tiny (<128 elem) tail in
    # plain jnp, reassembled with dynamic_update_slice. NOTE: this still pays
    # ~2-3x HBM traffic vs. the aligned path (the pallas custom call blocks
    # XLA fusion of the slice/assembly); prefer n % 128 == 0 shapes.
    n_main = (n // 128) * 128
    tail_out = _mean_act_jnp(x_flat[n_main:])
    if n_main == 0:
        return tail_out.reshape(orig_shape)
    main_out = _mean_act_flat(x_flat[:n_main])
    out = jnp.zeros((n,), dtype=x.dtype)
    out = lax.dynamic_update_slice(out, main_out, (0,))
    out = lax.dynamic_update_slice(out, tail_out, (n_main,))
    return out.reshape(orig_shape)


if __name__ == "__main__":
    key = jax.random.PRNGKey(0)
    k0, k1, k2 = jax.random.split(key, 3)

    # Main case: NCHW-style decoder output, element count divisible by 128.
    x = jax.random.normal(k0, (2, 4, 16, 16), dtype=jnp.float32)
    y = jax.block_until_ready(mean_act(x))
    y_ref = jnp.clip(jnp.exp(x), 1e-05, 1e06)
    assert y.shape == x.shape and y.dtype == x.dtype
    assert jnp.allclose(y, y_ref, rtol=1e-6, atol=1e-6)

    # Ragged case (n % 128 != 0): kernel prefix + jnp tail + dynamic_update_slice.
    xr = jax.random.normal(k1, (2, 131), dtype=jnp.float32)
    yr = jax.block_until_ready(mean_act(xr))
    yr_ref = jnp.clip(jnp.exp(xr), 1e-05, 1e06)
    assert yr.shape == xr.shape and yr.dtype == xr.dtype
    assert jnp.allclose(yr, yr_ref, rtol=1e-6, atol=1e-6)

    # bf16 case (native bf16 compute on v6e/v7x, f32 upcast elsewhere).
    xb = jax.random.normal(k2, (4, 8, 32), dtype=jnp.bfloat16)
    yb = jax.block_until_ready(mean_act(xb))
    yb_ref = jnp.clip(jnp.exp(xb.astype(jnp.float32)), 1e-05, 1e06).astype(jnp.bfloat16)
    assert yb.shape == xb.shape and yb.dtype == xb.dtype
    assert jnp.allclose(yb.astype(jnp.float32), yb_ref.astype(jnp.float32),
                        rtol=5e-2, atol=1e-5)

    print("KERNEL_OK")
</pallas_src>

<mosaic_0001>
module attributes {stable_mosaic.version = 11 : i64} {
  func.func @_mean_act_kernel(%arg0: i32, %arg1: memref<8x2048xf32, #tpu.memory_space<vmem>>, %arg2: memref<8x2048xf32, #tpu.memory_space<vmem>>) attributes {dimension_semantics = [#tpu.dimension_semantics<parallel>], iteration_bounds = array<i64: 1>, scalar_prefetch = 0 : i64, scratch_operands = 0 : i64, tpu.core_type = #tpu.core_type<tc>, window_params = [{transform_indices = @transform_0, window_bounds = array<i64: 8, 2048>}, {transform_indices = @transform_1, window_bounds = array<i64: 8, 2048>}]} {
    %c0 = arith.constant 0 : index
    %c0_0 = arith.constant 0 : index
    %0 = vector.load %arg1[%c0, %c0_0] : memref<8x2048xf32, #tpu.memory_space<vmem>>, vector<8x2048xf32>
    %1 = math.exp %0 : vector<8x2048xf32>
    %cst = arith.constant 9.99999974E-6 : f32
    %cst_1 = arith.constant 1.000000e+06 : f32
    %2 = vector.broadcast %cst : f32 to vector<8x2048xf32>
    %3 = arith.maximumf %2, %1 : vector<8x2048xf32>
    %4 = vector.broadcast %cst_1 : f32 to vector<8x2048xf32>
    %5 = arith.minimumf %4, %3 : vector<8x2048xf32>
    %c0_2 = arith.constant 0 : index
    %c0_3 = arith.constant 0 : index
    %6 = vector.load %arg2[%c0_2, %c0_3] : memref<8x2048xf32, #tpu.memory_space<vmem>>, vector<8x2048xf32>
    tpu.vector_store %arg2[%c0_2, %c0_3], %5 {strides = array<i32>} : memref<8x2048xf32, #tpu.memory_space<vmem>>, vector<8x2048xf32>,
    return
  }
  func.func @transform_0(%arg0: i32) -> (i32, i32) {
    %c0_i32 = arith.constant 0 : i32
    %c0_i32_0 = arith.constant 0 : i32
    return %arg0, %c0_i32 : i32, i32
  }
  func.func @transform_1(%arg0: i32) -> (i32, i32) {
    %c0_i32 = arith.constant 0 : i32
    %c0_i32_0 = arith.constant 0 : i32
    return %arg0, %c0_i32 : i32, i32
  }
}

</mosaic_0001>

<llo_original>
// kernel: tpu_custom_call.1
$region0: #{tpu_custom_call.1}
  #allocation0 [shape = 'u32[]', space=smem, size = 0x4, offset = 0x4, fixed_abs, tag = 'smem constant byte address 0x4 - core index']
  #allocation1 [shape = 'u32[144,128]{1,0:T(1,128)}', space=vmem, size = 0x12000, scoped, tag = 'internal scratch']
  %s0 = inlined_call_operand.hbm [shape: f32[1,2048], index: 0, kind: input, shape index: {}]
  %s1 = inlined_call_operand.hbm [shape: f32[1,2048], index: 1, kind: output, shape index: {}]
  %s2 = sld [smem:[#allocation0]]
  $region18: #{tpu_custom_call.1} parent=0
    _
  %s4 = ssub.s32 1, %s2
  %s5 = scalar_select 0, %s4, %s2
  $region1: #{tpu_custom_call.1} parent=0
    #allocation2 [shape = 'u8[65536]{0}', space=vmem, size = 0x10000, scoped, tag = 'input window, operand 0, single buffered']
    #allocation3 [shape = 's32[1]{0}', space=sflag, size = 0x4, scoped, tag = 'scoped memory for tpu_custom_call.1']
    #allocation4 [shape = 's32[1]{0}', space=sflag, size = 0x4, scoped, tag = 'scoped memory for tpu_custom_call.1']
    #allocation5 [shape = 'u8[65536]{0}', space=vmem, size = 0x10000, scoped, tag = 'output window, operand 0, single buffered']
    %6 = vsyncpa [#allocation3], 0
    %7 = vsyncpa [#allocation4], 0
    // Predicated region
    $region2: #{tpu_custom_call.1} parent=1 // pred_check
      _
    $region3: #{tpu_custom_call.1} parent=1 // pred_check_branch
      %9 = sbr.rel (0) target = $region5
    $region4: #{tpu_custom_call.1} parent=1 // pred_region
      %s11 = ssub.s32 2048, 256
      %12 = vsyncadd [#allocation3], %s11
      %s13 = sshll.u32 [#allocation2], 4
      %s14 = int_to_ptr.vmem [resolvable:$true] %s13
      %19 = dma.hbm_to_vmem [thread:$0]  %s0, 256, %s14, [#allocation3], 256, 256, 16
    $region5: #{tpu_custom_call.1} parent=1 // pred_fallthru
      _
    // Predicated region
    $region6: #{tpu_custom_call.1} parent=1 // pred_check
      _
    $region7: #{tpu_custom_call.1} parent=1 // pred_check_branch
      %21 = sbr.rel (0) target = $region9
    $region8: #{tpu_custom_call.1} parent=1 // pred_region
      %22 = dma.done [#allocation3], 2048
    $region9: #{tpu_custom_call.1} parent=1 // pred_fallthru
      _
    %v23 = vld [vmem:[#allocation2] sm:$0xff]
    %v24 = vld [vmem:[#allocation2 + $0x8] sm:$0xff]
    %v25 = vld [vmem:[#allocation2 + $0x10] sm:$0xff]
    %v26 = vld [vmem:[#allocation2 + $0x18] sm:$0xff]
    %v27 = vld [vmem:[#allocation2 + $0x20] sm:$0xff]
    %v28 = vld [vmem:[#allocation2 + $0x28] sm:$0xff]
    %v29 = vld [vmem:[#allocation2 + $0x30] sm:$0xff]
    %v30 = vld [vmem:[#allocation2 + $0x38] sm:$0xff]
    %v31 = vld [vmem:[#allocation2 + $0x40] sm:$0xff]
    %v32 = vld [vmem:[#allocation2 + $0x48] sm:$0xff]
    %v33 = vld [vmem:[#allocation2 + $0x50] sm:$0xff]
    %v34 = vld [vmem:[#allocation2 + $0x58] sm:$0xff]
    %v35 = vld [vmem:[#allocation2 + $0x60] sm:$0xff]
    %v36 = vld [vmem:[#allocation2 + $0x68] sm:$0xff]
    %v37 = vld [vmem:[#allocation2 + $0x70] sm:$0xff]
    %v38 = vld [vmem:[#allocation2 + $0x78] sm:$0xff]
    %v39 = vmul.f32 %v23, 1.442695
    %v40 = vpow.pop %v39
    %v41 = vmul.f32 %v24, 1.442695
    %v42 = vpow.pop %v41
    %v43 = vmul.f32 %v25, 1.442695
    %v44 = vpow.pop %v43
    %v45 = vmul.f32 %v26, 1.442695
    %v46 = vpow.pop %v45
    %v47 = vmul.f32 %v27, 1.442695
    %v48 = vpow.pop %v47
    %v49 = vmul.f32 %v28, 1.442695
    %v50 = vpow.pop %v49
    %v51 = vmul.f32 %v29, 1.442695
    %v52 = vpow.pop %v51
    %v53 = vmul.f32 %v30, 1.442695
    %v54 = vpow.pop %v53
    %v55 = vmul.f32 %v31, 1.442695
    %v56 = vpow.pop %v55
    %v57 = vmul.f32 %v32, 1.442695
    %v58 = vpow.pop %v57
    %v59 = vmul.f32 %v33, 1.442695
    %v60 = vpow.pop %v59
    %v61 = vmul.f32 %v34, 1.442695
    %v62 = vpow.pop %v61
    %v63 = vmul.f32 %v35, 1.442695
    %v64 = vpow.pop %v63
    %v65 = vmul.f32 %v36, 1.442695
    %v66 = vpow.pop %v65
    %v67 = vmul.f32 %v37, 1.442695
    %v68 = vpow.pop %v67
    %v69 = vmul.f32 %v38, 1.442695
    %v70 = vpow.pop %v69
    %v71 = vmax.f32 %v40, 1e-05
    %v72 = vmax.f32 %v42, 1e-05
    %v73 = vmax.f32 %v44, 1e-05
    %v74 = vmax.f32 %v46, 1e-05
    %v75 = vmax.f32 %v48, 1e-05
    %v76 = vmax.f32 %v50, 1e-05
    %v77 = vmax.f32 %v52, 1e-05
    %v78 = vmax.f32 %v54, 1e-05
    %v79 = vmax.f32 %v56, 1e-05
    %v80 = vmax.f32 %v58, 1e-05
    %v81 = vmax.f32 %v60, 1e-05
    %v82 = vmax.f32 %v62, 1e-05
    %v83 = vmax.f32 %v64, 1e-05
    %v84 = vmax.f32 %v66, 1e-05
    %v85 = vmax.f32 %v68, 1e-05
    %v86 = vmax.f32 %v70, 1e-05
    %v87 = vmin.f32 %v71, 1000000.0
    %v88 = vmin.f32 %v72, 1000000.0
    %v89 = vmin.f32 %v73, 1000000.0
    %v90 = vmin.f32 %v74, 1000000.0
    %v91 = vmin.f32 %v75, 1000000.0
    %v92 = vmin.f32 %v76, 1000000.0
    %v93 = vmin.f32 %v77, 1000000.0
    %v94 = vmin.f32 %v78, 1000000.0
    %v95 = vmin.f32 %v79, 1000000.0
    %v96 = vmin.f32 %v80, 1000000.0
    %v97 = vmin.f32 %v81, 1000000.0
    %v98 = vmin.f32 %v82, 1000000.0
    %v99 = vmin.f32 %v83, 1000000.0
    %v100 = vmin.f32 %v84, 1000000.0
    %v101 = vmin.f32 %v85, 1000000.0
    %v102 = vmin.f32 %v86, 1000000.0
    %103 = vst [vmem:[#allocation5] sm:$0xff] %v87
    %104 = vst [vmem:[#allocation5 + $0x8] sm:$0xff] %v88
    %105 = vst [vmem:[#allocation5 + $0x10] sm:$0xff] %v89
    %106 = vst [vmem:[#allocation5 + $0x18] sm:$0xff] %v90
    %107 = vst [vmem:[#allocation5 + $0x20] sm:$0xff] %v91
    %108 = vst [vmem:[#allocation5 + $0x28] sm:$0xff] %v92
    %109 = vst [vmem:[#allocation5 + $0x30] sm:$0xff] %v93
    %110 = vst [vmem:[#allocation5 + $0x38] sm:$0xff] %v94
    %111 = vst [vmem:[#allocation5 + $0x40] sm:$0xff] %v95
    %112 = vst [vmem:[#allocation5 + $0x48] sm:$0xff] %v96
    %113 = vst [vmem:[#allocation5 + $0x50] sm:$0xff] %v97
    %114 = vst [vmem:[#allocation5 + $0x58] sm:$0xff] %v98
    %115 = vst [vmem:[#allocation5 + $0x60] sm:$0xff] %v99
    %116 = vst [vmem:[#allocation5 + $0x68] sm:$0xff] %v100
    %117 = vst [vmem:[#allocation5 + $0x70] sm:$0xff] %v101
    %118 = vst [vmem:[#allocation5 + $0x78] sm:$0xff] %v102
    // Predicated region
    $region10: #{tpu_custom_call.1} parent=1 // pred_check
      _
    $region11: #{tpu_custom_call.1} parent=1 // pred_check_branch
      %120 = sbr.rel (0) target = $region13
    $region12: #{tpu_custom_call.1} parent=1 // pred_region
      %s122 = ssub.s32 2048, 256
      %123 = vsyncadd [#allocation4], %s122
      %s124 = sshll.u32 [#allocation5], 4
      %s125 = int_to_ptr.vmem [resolvable:$true] %s124
      %130 = dma.vmem_to_hbm [thread:$0]  %s125, 256, %s1, [#allocation4], 256, 256, 16
    $region13: #{tpu_custom_call.1} parent=1 // pred_fallthru
      _
    // Predicated region
    $region14: #{tpu_custom_call.1} parent=1 // pred_check
      _
    $region15: #{tpu_custom_call.1} parent=1 // pred_check_branch
      %132 = sbr.rel (0) target = $region17
    $region16: #{tpu_custom_call.1} parent=1 // pred_region
      %133 = dma.done [#allocation4], 2048
    $region17: #{tpu_custom_call.1} parent=1 // pred_fallthru
      _
    %134 = vsyncpa [#allocation3], 1
    %135 = vsyncpa [#allocation4], 1

</llo_original>
